<compile_context>
chip_gen: v6e
topology: v6e:2x2x1
jax: 0.10.0
libtpu: 0.0.40
codegen_flags: <defaults>
</compile_context>

<pallas_src>
import math

import jax
import jax.numpy as jnp
from jax.experimental import pallas as pl
from jax.experimental.pallas import tpu as pltpu

HIDDEN = 32                    # config.HIDDEN
N_ACT_I = 3                    # actionSpace default head sizes
N_ACT_J = 5
N_LOGITS = N_ACT_I + N_ACT_J   # torch.cat(logits, dim=1) width -> 8
SLAB = 4 * HIDDEN              # 128-lane per-step output slab
HEAD_W = SLAB - 2 * HIDDEN     # 64 tail lanes: [logits | value | zero pad]

# Output-slab lane layout (all f32):
_H1_OFF = 0
_C1_OFF = HIDDEN
_LOGIT_OFF = 2 * HIDDEN
_VALUE_OFF = 2 * HIDDEN + N_LOGITS


def _policy_kernel(obs_ref, h0_ref, c0_ref,
                   w_in_ref, b_in_ref,
                   w_gates_ref, b_gates_ref,
                   w_head_ref, b_head_ref,
                   out_ref, h_sc, c_sc):
    t = pl.program_id(1)

    # Load the recurrent state into VMEM scratch at the first timestep of this
    # batch block; it is carried in f32 scratch across the T ("arbitrary") axis.
    @pl.when(t == 0)
    def _():
        h_sc[...] = h0_ref[...]
        c_sc[...] = c0_ref[...]

    # Input FC + ReLU (bf16 MXU operands, f32 accumulation).
    x = jnp.dot(obs_ref[...].astype(jnp.bfloat16), w_in_ref[...],
                preferred_element_type=jnp.float32) + b_in_ref[...]
    x = jnp.maximum(x, 0.0)
    # TODO(synk): at rollout-scale batches make this K=obs_dim matmul lane-dense
    # (fold K chunks across lanes) and/or int8 (v5e/v6e) / fp8 (v7x) quantize w_in.

    h_prev = h_sc[...]
    c_prev = c_sc[...]

    # Fused LSTM gates: one [BB, 2H] @ [2H, 4H] MXU push whose output is a full
    # 128-lane vreg; columns follow PyTorch LSTMCell (i, f, g, o) order.
    xh = jnp.concatenate([x, h_prev], axis=1).astype(jnp.bfloat16)
    gates = jnp.dot(xh, w_gates_ref[...],
                    preferred_element_type=jnp.float32) + b_gates_ref[...]

    # Nonlinearities once over the full vreg (EUP slot), then lane slices.
    sig = jax.nn.sigmoid(gates)
    tnh = jnp.tanh(gates)
    i_g = sig[:, 0 * HIDDEN:1 * HIDDEN]
    f_g = sig[:, 1 * HIDDEN:2 * HIDDEN]
    g_g = tnh[:, 2 * HIDDEN:3 * HIDDEN]
    o_g = sig[:, 3 * HIDDEN:4 * HIDDEN]

    c1 = f_g * c_prev + i_g * g_g          # f32 VPU/EUP math (v5e-safe)
    h1 = o_g * jnp.tanh(c1)

    # Fused value + action heads: one [H, 64] matmul whose columns are already
    # at their slab-tail positions (cols 0:3 / 3:8 = Discrete(3)/Discrete(5)
    # logits, col 8 = value, rest zero).
    head = jnp.dot(h1.astype(jnp.bfloat16), w_head_ref[...],
                   preferred_element_type=jnp.float32) + b_head_ref[...]

    # Single lane-dense [BB, 128] slab -> one unmasked store per step.
    out_ref[...] = jnp.concatenate([h1, c1, head], axis=1)

    # Carry exact f32 state to the next timestep.
    h_sc[...] = h1
    c_sc[...] = c1


def rllib_policy_forward(obs_tbchw, h0, c0, params, *, batch_block=None):
    """obs_tbchw: [T, B, C, H, W] float32; h0/c0: [B, HIDDEN] float32.

    Returns (logits [T, B, 8], value [T, B, 1], (h_T, c_T))."""
    T, B = obs_tbchw.shape[:2]
    D = math.prod(obs_tbchw.shape[2:])
    obs = obs_tbchw.reshape(T, B, D)          # contiguous reshape (no extra cast copy)

    # Pad the agent axis to a sublane multiple so every store is unmasked.
    # TODO(synk): at rollout scale the env batcher should emit padded flat obs
    # directly so this pad never materialises an extra HBM copy.
    Bp = max(8, -(-B // 8) * 8)
    if Bp != B:
        obs = jnp.pad(obs, ((0, 0), (0, Bp - B), (0, 0)))
        h0 = jnp.pad(h0, ((0, Bp - B), (0, 0)))
        c0 = jnp.pad(c0, ((0, Bp - B), (0, 0)))

    bb = batch_block or min(Bp, 256)          # agents per batch block
    bb = min(bb, Bp)
    assert Bp % bb == 0
    grid = (Bp // bb, T)                      # batch "parallel" (v7x megacore), T "arbitrary"

    const = lambda b, t: (0, 0)               # VMEM-resident weights (DMA'd once)
    inputs = (obs, h0, c0,
              params["w_in"], params["b_in"],
              params["w_gates"], params["b_gates"],
              params["w_head"], params["b_head"])
    in_specs = [
        pl.BlockSpec((pl.Squeezed(), bb, D), lambda b, t: (t, b, 0)),   # obs[t]
        pl.BlockSpec((bb, HIDDEN), lambda b, t: (b, 0)),                # h0
        pl.BlockSpec((bb, HIDDEN), lambda b, t: (b, 0)),                # c0
        pl.BlockSpec((D, HIDDEN), const),                               # w_in
        pl.BlockSpec((1, HIDDEN), const),                               # b_in
        pl.BlockSpec((2 * HIDDEN, 4 * HIDDEN), const),                  # w_gates
        pl.BlockSpec((1, 4 * HIDDEN), const),                           # b_gates
        pl.BlockSpec((HIDDEN, HEAD_W), const),                          # w_head
        pl.BlockSpec((1, HEAD_W), const),                               # b_head
    ]
    out_specs = pl.BlockSpec((pl.Squeezed(), bb, SLAB), lambda b, t: (t, b, 0))

    slab = pl.pallas_call(
        _policy_kernel,
        grid=grid,
        in_specs=in_specs,
        out_specs=out_specs,
        out_shape=jax.ShapeDtypeStruct((T, Bp, SLAB), jnp.float32),
        scratch_shapes=[pltpu.VMEM((bb, HIDDEN), jnp.float32),   # h carry
                        pltpu.VMEM((bb, HIDDEN), jnp.float32)],  # c carry
        compiler_params=pltpu.CompilerParams(
            dimension_semantics=("parallel", "arbitrary")),
    )(*inputs)

    logits = slab[:, :B, _LOGIT_OFF:_LOGIT_OFF + N_LOGITS]
    value = slab[:, :B, _VALUE_OFF:_VALUE_OFF + 1]
    h_t = slab[T - 1, :B, _H1_OFF:_H1_OFF + HIDDEN]
    c_t = slab[T - 1, :B, _C1_OFF:_C1_OFF + HIDDEN]
    return logits, value, (h_t, c_t)


def make_params(key, obs_dim):
    ks = jax.random.split(key, 7)
    scale = 0.05

    # Fused value/action head weight, pre-placed at its slab-tail columns.
    w_act = scale * jax.random.normal(ks[2], (HIDDEN, N_LOGITS), jnp.float32)
    w_val = scale * jax.random.normal(ks[3], (HIDDEN, 1), jnp.float32)
    w_head = jnp.zeros((HIDDEN, HEAD_W), jnp.float32)
    w_head = w_head.at[:, :N_LOGITS].set(w_act)
    w_head = w_head.at[:, N_LOGITS:N_LOGITS + 1].set(w_val)

    b_head = jnp.zeros((1, HEAD_W), jnp.float32)
    b_head = b_head.at[:, :N_LOGITS + 1].set(
        scale * jax.random.normal(ks[4], (1, N_LOGITS + 1), jnp.float32))

    return {
        # bf16 weights (MXU-native); biases stay f32.
        "w_in":    (scale * jax.random.normal(ks[0], (obs_dim, HIDDEN),
                                              jnp.float32)).astype(jnp.bfloat16),
        "b_in":    scale * jax.random.normal(ks[5], (1, HIDDEN), jnp.float32),
        # Rows 0:H are W_x, rows H:2H are W_h; columns [i | f | g | o].
        "w_gates": (scale * jax.random.normal(ks[1], (2 * HIDDEN, 4 * HIDDEN),
                                              jnp.float32)).astype(jnp.bfloat16),
        "b_gates": scale * jax.random.normal(ks[6], (1, 4 * HIDDEN), jnp.float32),
        "w_head":  w_head.astype(jnp.bfloat16),
        "b_head":  b_head,
    }


def _reference(obs_tbchw, h0, c0, p):
    """Pure-JAX reference mirroring the kernel's numerics (bf16 MXU operands,
    f32 accumulation, HIGHEST precision), rolled over T with lax.scan."""
    hp = jax.lax.Precision.HIGHEST
    T, B = obs_tbchw.shape[:2]
    obs = obs_tbchw.reshape(T, B, -1)

    def step(carry, o_t):
        h, c = carry
        x = jnp.dot(o_t.astype(jnp.bfloat16), p["w_in"],
                    preferred_element_type=jnp.float32, precision=hp) + p["b_in"]
        x = jnp.maximum(x, 0.0)
        xh = jnp.concatenate([x, h], axis=1).astype(jnp.bfloat16)
        gates = jnp.dot(xh, p["w_gates"], preferred_element_type=jnp.float32,
                        precision=hp) + p["b_gates"]
        i_g = jax.nn.sigmoid(gates[:, 0 * HIDDEN:1 * HIDDEN])
        f_g = jax.nn.sigmoid(gates[:, 1 * HIDDEN:2 * HIDDEN])
        g_g = jnp.tanh(gates[:, 2 * HIDDEN:3 * HIDDEN])
        o_g = jax.nn.sigmoid(gates[:, 3 * HIDDEN:4 * HIDDEN])
        c1 = f_g * c + i_g * g_g
        h1 = o_g * jnp.tanh(c1)
        head = jnp.dot(h1.astype(jnp.bfloat16), p["w_head"],
                       preferred_element_type=jnp.float32, precision=hp) + p["b_head"]
        return (h1, c1), (head[:, :N_LOGITS], head[:, N_LOGITS:N_LOGITS + 1])

    (h_t, c_t), (logits, values) = jax.lax.scan(step, (h0, c0), obs)
    return logits, values, (h_t, c_t)


if __name__ == "__main__":
    key = jax.random.PRNGKey(0)
    k_obs, k_par = jax.random.split(key)

    T, B, C, H, W = 8, 2, 4, 16, 16
    obs = jax.random.normal(k_obs, (T, B, C, H, W), jnp.float32)  # NCHW per step
    # get_initial_state(): zero (h, c) of width HIDDEN
    h0 = jnp.zeros((B, HIDDEN), jnp.float32)
    c0 = jnp.zeros((B, HIDDEN), jnp.float32)

    params = make_params(k_par, obs_dim=C * H * W)

    logits, value, (h_t, c_t) = rllib_policy_forward(obs, h0, c0, params)
    jax.block_until_ready((logits, value, h_t, c_t))

    r_logits, r_value, (r_h, r_c) = _reference(obs, h0, c0, params)
    assert logits.shape == (T, B, N_LOGITS)
    assert value.shape == (T, B, 1)
    assert h_t.shape == (B, HIDDEN) and c_t.shape == (B, HIDDEN)
    assert jnp.allclose(logits, r_logits, atol=2e-3), \
        float(jnp.max(jnp.abs(logits - r_logits)))
    assert jnp.allclose(value, r_value, atol=2e-3)
    assert jnp.allclose(h_t, r_h, atol=2e-3)
    assert jnp.allclose(c_t, r_c, atol=2e-3)

    print("KERNEL_OK")
</pallas_src>

<mosaic_0001>
module attributes {stable_mosaic.version = 11 : i64} {
  func.func @_policy_kernel(%arg0: i32, %arg1: i32, %arg2: memref<1x8x1024xf32, #tpu.memory_space<vmem>>, %arg3: memref<8x32xf32, #tpu.memory_space<vmem>>, %arg4: memref<8x32xf32, #tpu.memory_space<vmem>>, %arg5: memref<1024x32xbf16, #tpu.memory_space<vmem>>, %arg6: memref<1x32xf32, #tpu.memory_space<vmem>>, %arg7: memref<64x128xbf16, #tpu.memory_space<vmem>>, %arg8: memref<1x128xf32, #tpu.memory_space<vmem>>, %arg9: memref<32x64xbf16, #tpu.memory_space<vmem>>, %arg10: memref<1x64xf32, #tpu.memory_space<vmem>>, %arg11: memref<1x8x128xf32, #tpu.memory_space<vmem>>, %arg12: memref<8x32xf32, #tpu.memory_space<vmem>>, %arg13: memref<8x32xf32, #tpu.memory_space<vmem>>) attributes {dimension_semantics = [#tpu.dimension_semantics<parallel>, #tpu.dimension_semantics<arbitrary>], iteration_bounds = array<i64: 1, 8>, scalar_prefetch = 0 : i64, scratch_operands = 2 : i64, tpu.core_type = #tpu.core_type<tc>, window_params = [{transform_indices = @transform_0, window_bounds = array<i64: 1, 8, 1024>}, {transform_indices = @transform_1, window_bounds = array<i64: 8, 32>}, {transform_indices = @transform_2, window_bounds = array<i64: 8, 32>}, {pipeline_mode = #tpu.pipeline_mode<synchronous>, transform_indices = @transform_3, window_bounds = array<i64: 1024, 32>}, {pipeline_mode = #tpu.pipeline_mode<synchronous>, transform_indices = @transform_4, window_bounds = array<i64: 1, 32>}, {pipeline_mode = #tpu.pipeline_mode<synchronous>, transform_indices = @transform_5, window_bounds = array<i64: 64, 128>}, {pipeline_mode = #tpu.pipeline_mode<synchronous>, transform_indices = @transform_6, window_bounds = array<i64: 1, 128>}, {pipeline_mode = #tpu.pipeline_mode<synchronous>, transform_indices = @transform_7, window_bounds = array<i64: 32, 64>}, {pipeline_mode = #tpu.pipeline_mode<synchronous>, transform_indices = @transform_8, window_bounds = array<i64: 1, 64>}, {transform_indices = @transform_9, window_bounds = array<i64: 1, 8, 128>}]} {
    %c0_i32 = arith.constant 0 : i32
    %0 = arith.cmpi eq, %arg1, %c0_i32 : i32
    %1 = arith.extui %0 : i1 to i32
    %c0_i32_0 = arith.constant 0 : i32
    %2 = arith.cmpi ne, %1, %c0_i32_0 : i32
    scf.if %2 {
      %c0_30 = arith.constant 0 : index
      %c0_31 = arith.constant 0 : index
      %49 = vector.load %arg3[%c0_30, %c0_31] : memref<8x32xf32, #tpu.memory_space<vmem>>, vector<8x32xf32>
      %c0_32 = arith.constant 0 : index
      %c0_33 = arith.constant 0 : index
      %50 = vector.load %arg12[%c0_32, %c0_33] : memref<8x32xf32, #tpu.memory_space<vmem>>, vector<8x32xf32>
      tpu.vector_store %arg12[%c0_32, %c0_33], %49 {strides = array<i32>} : memref<8x32xf32, #tpu.memory_space<vmem>>, vector<8x32xf32>,
      %c0_34 = arith.constant 0 : index
      %c0_35 = arith.constant 0 : index
      %51 = vector.load %arg4[%c0_34, %c0_35] : memref<8x32xf32, #tpu.memory_space<vmem>>, vector<8x32xf32>
      %c0_36 = arith.constant 0 : index
      %c0_37 = arith.constant 0 : index
      %52 = vector.load %arg13[%c0_36, %c0_37] : memref<8x32xf32, #tpu.memory_space<vmem>>, vector<8x32xf32>
      tpu.vector_store %arg13[%c0_36, %c0_37], %51 {strides = array<i32>} : memref<8x32xf32, #tpu.memory_space<vmem>>, vector<8x32xf32>,
    } else {
    }
    %c0 = arith.constant 0 : index
    %c0_1 = arith.constant 0 : index
    %c0_2 = arith.constant 0 : index
    %3 = vector.load %arg2[%c0, %c0_1, %c0_2] : memref<1x8x1024xf32, #tpu.memory_space<vmem>>, vector<1x8x1024xf32>
    %4 = vector.shape_cast %3 : vector<1x8x1024xf32> to vector<8x1024xf32>
    %5 = arith.truncf %4 : vector<8x1024xf32> to vector<8x1024xbf16>
    %c0_3 = arith.constant 0 : index
    %c0_4 = arith.constant 0 : index
    %6 = vector.load %arg5[%c0_3, %c0_4] : memref<1024x32xbf16, #tpu.memory_space<vmem>>, vector<1024x32xbf16>
    %cst = arith.constant dense<0.000000e+00> : vector<8x32xf32>
    %7 = tpu.matmul %5, %6, %cst {dimension_numbers = #tpu.dot_dimension_numbers<[1], [0], [0], [1], [0, 0, 1, 1], [], []>} : vector<8x1024xbf16>, vector<1024x32xbf16>, vector<8x32xf32> -> vector<8x32xf32>
    %c0_5 = arith.constant 0 : index
    %c0_6 = arith.constant 0 : index
    %8 = vector.load %arg6[%c0_5, %c0_6] : memref<1x32xf32, #tpu.memory_space<vmem>>, vector<1x32xf32>
    %9 = vector.broadcast %8 : vector<1x32xf32> to vector<8x32xf32>
    %10 = arith.addf %7, %9 : vector<8x32xf32>
    %cst_7 = arith.constant 0.000000e+00 : f32
    %11 = vector.broadcast %cst_7 : f32 to vector<8x32xf32>
    %12 = arith.maximumf %10, %11 : vector<8x32xf32>
    %c0_8 = arith.constant 0 : index
    %c0_9 = arith.constant 0 : index
    %13 = vector.load %arg12[%c0_8, %c0_9] : memref<8x32xf32, #tpu.memory_space<vmem>>, vector<8x32xf32>
    %c0_10 = arith.constant 0 : index
    %c0_11 = arith.constant 0 : index
    %14 = vector.load %arg13[%c0_10, %c0_11] : memref<8x32xf32, #tpu.memory_space<vmem>>, vector<8x32xf32>
    %15 = tpu.concatenate %12, %13 in 1 : vector<8x32xf32>, vector<8x32xf32> -> vector<8x64xf32>
    %16 = arith.truncf %15 : vector<8x64xf32> to vector<8x64xbf16>
    %c0_12 = arith.constant 0 : index
    %c0_13 = arith.constant 0 : index
    %17 = vector.load %arg7[%c0_12, %c0_13] : memref<64x128xbf16, #tpu.memory_space<vmem>>, vector<64x128xbf16>
    %cst_14 = arith.constant dense<0.000000e+00> : vector<8x128xf32>
    %18 = tpu.matmul %16, %17, %cst_14 {dimension_numbers = #tpu.dot_dimension_numbers<[1], [0], [0], [1], [0, 0, 1, 1], [], []>} : vector<8x64xbf16>, vector<64x128xbf16>, vector<8x128xf32> -> vector<8x128xf32>
    %c0_15 = arith.constant 0 : index
    %c0_16 = arith.constant 0 : index
    %19 = vector.load %arg8[%c0_15, %c0_16] : memref<1x128xf32, #tpu.memory_space<vmem>>, vector<1x128xf32>
    %20 = vector.broadcast %19 : vector<1x128xf32> to vector<8x128xf32>
    %21 = arith.addf %18, %20 : vector<8x128xf32>
    %22 = arith.negf %21 : vector<8x128xf32>
    %23 = math.exp %22 : vector<8x128xf32>
    %cst_17 = arith.constant 1.000000e+00 : f32
    %24 = vector.broadcast %cst_17 : f32 to vector<8x128xf32>
    %25 = arith.addf %24, %23 : vector<8x128xf32>
    %26 = arith.divf %24, %25 : vector<8x128xf32>
    %27 = math.tanh %21 : vector<8x128xf32>
    %28 = vector.extract_strided_slice %26 {offsets = [0, 0], sizes = [8, 32], strides = [1, 1]} : vector<8x128xf32> to vector<8x32xf32>
    %29 = vector.extract_strided_slice %26 {offsets = [0, 32], sizes = [8, 32], strides = [1, 1]} : vector<8x128xf32> to vector<8x32xf32>
    %30 = vector.extract_strided_slice %27 {offsets = [0, 64], sizes = [8, 32], strides = [1, 1]} : vector<8x128xf32> to vector<8x32xf32>
    %31 = vector.extract_strided_slice %26 {offsets = [0, 96], sizes = [8, 32], strides = [1, 1]} : vector<8x128xf32> to vector<8x32xf32>
    %32 = arith.mulf %29, %14 : vector<8x32xf32>
    %33 = arith.mulf %28, %30 : vector<8x32xf32>
    %34 = arith.addf %32, %33 : vector<8x32xf32>
    %35 = math.tanh %34 : vector<8x32xf32>
    %36 = arith.mulf %31, %35 : vector<8x32xf32>
    %37 = arith.truncf %36 : vector<8x32xf32> to vector<8x32xbf16>
    %c0_18 = arith.constant 0 : index
    %c0_19 = arith.constant 0 : index
    %38 = vector.load %arg9[%c0_18, %c0_19] : memref<32x64xbf16, #tpu.memory_space<vmem>>, vector<32x64xbf16>
    %cst_20 = arith.constant dense<0.000000e+00> : vector<8x64xf32>
    %39 = tpu.matmul %37, %38, %cst_20 {dimension_numbers = #tpu.dot_dimension_numbers<[1], [0], [0], [1], [0, 0, 1, 1], [], []>} : vector<8x32xbf16>, vector<32x64xbf16>, vector<8x64xf32> -> vector<8x64xf32>
    %c0_21 = arith.constant 0 : index
    %c0_22 = arith.constant 0 : index
    %40 = vector.load %arg10[%c0_21, %c0_22] : memref<1x64xf32, #tpu.memory_space<vmem>>, vector<1x64xf32>
    %41 = vector.broadcast %40 : vector<1x64xf32> to vector<8x64xf32>
    %42 = arith.addf %39, %41 : vector<8x64xf32>
    %43 = tpu.concatenate %36, %34, %42 in 1 : vector<8x32xf32>, vector<8x32xf32>, vector<8x64xf32> -> vector<8x128xf32>
    %c0_23 = arith.constant 0 : index
    %c0_24 = arith.constant 0 : index
    %c0_25 = arith.constant 0 : index
    %44 = vector.load %arg11[%c0_23, %c0_24, %c0_25] : memref<1x8x128xf32, #tpu.memory_space<vmem>>, vector<1x8x128xf32>
    %45 = vector.shape_cast %44 : vector<1x8x128xf32> to vector<8x128xf32>
    %46 = vector.shape_cast %43 : vector<8x128xf32> to vector<1x8x128xf32>
    tpu.vector_store %arg11[%c0_23, %c0_24, %c0_25], %46 {strides = array<i32>} : memref<1x8x128xf32, #tpu.memory_space<vmem>>, vector<1x8x128xf32>,
    %c0_26 = arith.constant 0 : index
    %c0_27 = arith.constant 0 : index
    %47 = vector.load %arg12[%c0_26, %c0_27] : memref<8x32xf32, #tpu.memory_space<vmem>>, vector<8x32xf32>
    tpu.vector_store %arg12[%c0_26, %c0_27], %36 {strides = array<i32>} : memref<8x32xf32, #tpu.memory_space<vmem>>, vector<8x32xf32>,
    %c0_28 = arith.constant 0 : index
    %c0_29 = arith.constant 0 : index
    %48 = vector.load %arg13[%c0_28, %c0_29] : memref<8x32xf32, #tpu.memory_space<vmem>>, vector<8x32xf32>
    tpu.vector_store %arg13[%c0_28, %c0_29], %34 {strides = array<i32>} : memref<8x32xf32, #tpu.memory_space<vmem>>, vector<8x32xf32>,
    return
  }
  func.func @transform_0(%arg0: i32, %arg1: i32) -> (i32, i32, i32) {
    %c0_i32 = arith.constant 0 : i32
    %c0_i32_0 = arith.constant 0 : i32
    return %arg1, %arg0, %c0_i32 : i32, i32, i32
  }
  func.func @transform_1(%arg0: i32, %arg1: i32) -> (i32, i32) {
    %c0_i32 = arith.constant 0 : i32
    %c0_i32_0 = arith.constant 0 : i32
    return %arg0, %c0_i32 : i32, i32
  }
  func.func @transform_2(%arg0: i32, %arg1: i32) -> (i32, i32) {
    %c0_i32 = arith.constant 0 : i32
    %c0_i32_0 = arith.constant 0 : i32
    return %arg0, %c0_i32 : i32, i32
  }
  func.func @transform_3(%arg0: i32, %arg1: i32) -> (i32, i32) {
    %c0_i32 = arith.constant 0 : i32
    %c0_i32_0 = arith.constant 0 : i32
    %c0_i32_1 = arith.constant 0 : i32
    return %c0_i32, %c0_i32_0 : i32, i32
  }
  func.func @transform_4(%arg0: i32, %arg1: i32) -> (i32, i32) {
    %c0_i32 = arith.constant 0 : i32
    %c0_i32_0 = arith.constant 0 : i32
    %c0_i32_1 = arith.constant 0 : i32
    return %c0_i32, %c0_i32_0 : i32, i32
  }
  func.func @transform_5(%arg0: i32, %arg1: i32) -> (i32, i32) {
    %c0_i32 = arith.constant 0 : i32
    %c0_i32_0 = arith.constant 0 : i32
    %c0_i32_1 = arith.constant 0 : i32
    return %c0_i32, %c0_i32_0 : i32, i32
  }
  func.func @transform_6(%arg0: i32, %arg1: i32) -> (i32, i32) {
    %c0_i32 = arith.constant 0 : i32
    %c0_i32_0 = arith.constant 0 : i32
    %c0_i32_1 = arith.constant 0 : i32
    return %c0_i32, %c0_i32_0 : i32, i32
  }
  func.func @transform_7(%arg0: i32, %arg1: i32) -> (i32, i32) {
    %c0_i32 = arith.constant 0 : i32
    %c0_i32_0 = arith.constant 0 : i32
    %c0_i32_1 = arith.constant 0 : i32
    return %c0_i32, %c0_i32_0 : i32, i32
  }
  func.func @transform_8(%arg0: i32, %arg1: i32) -> (i32, i32) {
    %c0_i32 = arith.constant 0 : i32
    %c0_i32_0 = arith.constant 0 : i32
    %c0_i32_1 = arith.constant 0 : i32
    return %c0_i32, %c0_i32_0 : i32, i32
  }
  func.func @transform_9(%arg0: i32, %arg1: i32) -> (i32, i32, i32) {
    %c0_i32 = arith.constant 0 : i32
    %c0_i32_0 = arith.constant 0 : i32
    return %arg1, %arg0, %c0_i32 : i32, i32, i32
  }
}

</mosaic_0001>

<llo_original>
// kernel: tpu_custom_call.1
$region0: #{tpu_custom_call.1}
  #allocation0 [shape = 'u32[]', space=smem, size = 0x4, offset = 0x4, fixed_abs, tag = 'smem constant byte address 0x4 - core index']
  #allocation1 [shape = 'u32[144,128]{1,0:T(1,128)}', space=vmem, size = 0x12000, scoped, tag = 'internal scratch']
  #allocation2 [shape = 'f32[8,32]{1,0:T(8,128)}', space=vmem, size = 0x1000, scoped, tag = 'scratch operand']
  #allocation3 [shape = 'f32[8,32]{1,0:T(8,128)}', space=vmem, size = 0x1000, scoped, tag = 'scratch operand']
  %s0 = inlined_call_operand.vmem [shape: f32[8,8,1024], index: 0, kind: input, shape index: {}]
  %s1 = inlined_call_operand.vmem [shape: f32[8,32], index: 1, kind: input, shape index: {}]
  %s2 = inlined_call_operand.vmem [shape: f32[8,32], index: 2, kind: input, shape index: {}]
  %s3 = inlined_call_operand.vmem [shape: bf16[1024,32], index: 3, kind: input, shape index: {}]
  %s4 = inlined_call_operand.vmem [shape: f32[1,32], index: 4, kind: input, shape index: {}]
  %s5 = inlined_call_operand.vmem [shape: bf16[64,128], index: 5, kind: input, shape index: {}]
  %s6 = inlined_call_operand.vmem [shape: f32[1,128], index: 6, kind: input, shape index: {}]
  %s7 = inlined_call_operand.vmem [shape: bf16[32,64], index: 7, kind: input, shape index: {}]
  %s8 = inlined_call_operand.vmem [shape: f32[1,64], index: 8, kind: input, shape index: {}]
  %s9 = inlined_call_operand.hbm [shape: f32[8,8,128], index: 9, kind: output, shape index: {}]
  %s10 = sld [smem:[#allocation0]]
  $region73: #{tpu_custom_call.1} parent=0
    _
  %s12 = ssub.s32 1, %s10
  %s13 = scalar_select 0, %s12, %s10
  $region1: #{tpu_custom_call.1} parent=0
    #allocation4 [shape = 'u8[8192]{0}', space=vmem, size = 0x2000, scoped, tag = 'output window, operand 0']
    #allocation5 [shape = 's32[2]{0}', space=sflag, size = 0x8, scoped, tag = 'scoped memory for tpu_custom_call.1']
    %14 = vsyncpa [#allocation5], 0
    %s15 = scalar_lea.sflag [#allocation5], 1
    %16 = vsyncpa %s15, 0
    loop: start=0, step=1, limit=10
    $region2: #{tpu_custom_call.1} parent=1 // loop_pre_header
      _
    $region3: #{tpu_custom_call.1} parent=1 // loop_header
      %s18 = sphi 0, %s22
      %p19 = scmp.ge.s32.totalorder %s18, 10
      %s25 = sphi 0, %s37
      %s26 = sphi 0, %s33
      %s27 = sphi 0, %s25
      %s28 = sphi 0, %s26
      %s29 = sphi 0, %s27
      %s30 = sphi 0, %s28
      %s42 = sphi 0, %s44
      %s45 = sphi 0, %s42
      %s46 = sphi 0, %s45
      %s62 = sphi 0, %s46
      %s68 = sphi 0, %s70
      %s71 = sphi 0, %s68
      %s72 = sphi 0, %s71
      %s88 = sphi 0, %s72
      %s94 = sphi 0, %s96
      %s97 = sphi 0, %s94
      %s98 = sphi 0, %s97
      %s114 = sphi 0, %s98
      %s118 = sphi 0, %s118
      %s120 = sphi 0, %s118
      %s121 = sphi 0, %s120
      %s135 = sphi 0, %s121
      %s139 = sphi 0, %s139
      %s141 = sphi 0, %s139
      %s142 = sphi 0, %s141
      %s156 = sphi 0, %s142
      %s160 = sphi 0, %s160
      %s162 = sphi 0, %s160
      %s163 = sphi 0, %s162
      %s177 = sphi 0, %s163
      %s181 = sphi 0, %s181
      %s183 = sphi 0, %s181
      %s184 = sphi 0, %s183
      %s198 = sphi 0, %s184
      %s202 = sphi 0, %s202
      %s204 = sphi 0, %s202
      %s205 = sphi 0, %s204
      %s219 = sphi 0, %s205
      %s223 = sphi 0, %s223
      %s225 = sphi 0, %s223
      %s226 = sphi 0, %s225
      %s240 = sphi 0, %s226
      %s248 = sphi 0, %s250
      %s251 = sphi 0, %s248
      %s252 = sphi 0, %s251
      %s268 = sphi 0, %s252
    $region4: #{tpu_custom_call.1} parent=1 // loop_header_branch
      %21 = sbr.rel (%p19) target = $region8
    $region5: #{tpu_custom_call.1} parent=1 // loop_body
      %s23 = ssub.s32 %s18, 1
      %s24 = ssub.s32 %s18, 2
      %s31 = sadd.s32 1, %s26
      %p32 = scmp.ge.s32.totalorder %s31, 8
      %s33 = scalar_select %p32, 0, %s31
      %s34 = sadd.s32 1, %s25
      %s35 = scalar_select %p32, %s34, %s25
      %p36 = scmp.ge.s32.totalorder %s35, 1
      %s37 = scalar_select %p36, 0, %s35
      %s38 = ssub.s32 %s26, %s33
      %s39 = ssub.s32 %s25, %s37
      %s40 = sor.u32 %s38, %s39
      %p41 = scmp.eq.s32.totalorder %s40, 0
      %s43 = sadd.s32 %s42, 1
      %s44 = scalar_select %p41, %s42, %s43
      %p47 = pneg %p41
      %p48 = scmp.eq.s32.totalorder %s18, 7
      %p49 = por %p47, %p48
      %p50 = scmp.ne.s32.totalorder %s42, %s45
      %p51 = scmp.eq.s32.totalorder %s18, 0
      %p52 = por %p50, %p51
      %p53 = scmp.ne.s32.totalorder %s42, %s45
      %p54 = scmp.eq.s32.totalorder %s23, 7
      %p55 = por %p53, %p54
      %p56 = scmp.ne.s32.totalorder %s45, %s46
      %p57 = scmp.eq.s32.totalorder %s23, 0
      %p58 = por %p56, %p57
      %p59 = scmp.ne.s32.totalorder %s45, %s46
      %p60 = scmp.eq.s32.totalorder %s24, 7
      %p61 = por %p59, %p60
      %p63 = scmp.ne.s32.totalorder %s46, %s62
      %p64 = scmp.eq.s32.totalorder %s24, 0
      %p65 = por %p63, %p64
      %s66 = ssub.s32 %s25, %s37
      %p67 = scmp.eq.s32.totalorder %s66, 0
      %s69 = sadd.s32 %s68, 1
      %s70 = scalar_select %p67, %s68, %s69
      %p73 = pneg %p67
      %p74 = scmp.eq.s32.totalorder %s18, 7
      %p75 = por %p73, %p74
      %p76 = scmp.ne.s32.totalorder %s68, %s71
      %p77 = scmp.eq.s32.totalorder %s18, 0
      %p78 = por %p76, %p77
      %p79 = scmp.ne.s32.totalorder %s68, %s71
      %p80 = scmp.eq.s32.totalorder %s23, 7
      %p81 = por %p79, %p80
      %p82 = scmp.ne.s32.totalorder %s71, %s72
      %p83 = scmp.eq.s32.totalorder %s23, 0
      %p84 = por %p82, %p83
      %p85 = scmp.ne.s32.totalorder %s71, %s72
      %p86 = scmp.eq.s32.totalorder %s24, 7
      %p87 = por %p85, %p86
      %p89 = scmp.ne.s32.totalorder %s72, %s88
      %p90 = scmp.eq.s32.totalorder %s24, 0
      %p91 = por %p89, %p90
      %s92 = ssub.s32 %s25, %s37
      %p93 = scmp.eq.s32.totalorder %s92, 0
      %s95 = sadd.s32 %s94, 1
      %s96 = scalar_select %p93, %s94, %s95
      %p99 = pneg %p93
      %p100 = scmp.eq.s32.totalorder %s18, 7
      %p101 = por %p99, %p100
      %p102 = scmp.ne.s32.totalorder %s94, %s97
      %p103 = scmp.eq.s32.totalorder %s18, 0
      %p104 = por %p102, %p103
      %p105 = scmp.ne.s32.totalorder %s94, %s97
      %p106 = scmp.eq.s32.totalorder %s23, 7
      %p107 = por %p105, %p106
      %p108 = scmp.ne.s32.totalorder %s97, %s98
      %p109 = scmp.eq.s32.totalorder %s23, 0
      %p110 = por %p108, %p109
      %p111 = scmp.ne.s32.totalorder %s97, %s98
      %p112 = scmp.eq.s32.totalorder %s24, 7
      %p113 = por %p111, %p112
      %p115 = scmp.ne.s32.totalorder %s98, %s114
      %p116 = scmp.eq.s32.totalorder %s24, 0
      %p117 = por %p115, %p116
      %s119 = sadd.s32 %s118, 1
      %p122 = scmp.eq.s32.totalorder %s18, 7
      %p123 = scmp.ne.s32.totalorder %s118, %s120
      %p124 = scmp.eq.s32.totalorder %s18, 0
      %p125 = por %p123, %p124
      %p126 = scmp.ne.s32.totalorder %s118, %s120
      %p127 = scmp.eq.s32.totalorder %s23, 7
      %p128 = por %p126, %p127
      %p129 = scmp.ne.s32.totalorder %s120, %s121
      %p130 = scmp.eq.s32.totalorder %s23, 0
      %p131 = por %p129, %p130
      %p132 = scmp.ne.s32.totalorder %s120, %s121
      %p133 = scmp.eq.s32.totalorder %s24, 7
      %p134 = por %p132, %p133
      %p136 = scmp.ne.s32.totalorder %s121, %s135
      %p137 = scmp.eq.s32.totalorder %s24, 0
      %p138 = por %p136, %p137
      %s140 = sadd.s32 %s139, 1
      %p143 = scmp.eq.s32.totalorder %s18, 7
      %p144 = scmp.ne.s32.totalorder %s139, %s141
      %p145 = scmp.eq.s32.totalorder %s18, 0
      %p146 = por %p144, %p145
      %p147 = scmp.ne.s32.totalorder %s139, %s141
      %p148 = scmp.eq.s32.totalorder %s23, 7
      %p149 = por %p147, %p148
      %p150 = scmp.ne.s32.totalorder %s141, %s142
      %p151 = scmp.eq.s32.totalorder %s23, 0
      %p152 = por %p150, %p151
      %p153 = scmp.ne.s32.totalorder %s141, %s142
      %p154 = scmp.eq.s32.totalorder %s24, 7
      %p155 = por %p153, %p154
      %p157 = scmp.ne.s32.totalorder %s142, %s156
      %p158 = scmp.eq.s32.totalorder %s24, 0
      %p159 = por %p157, %p158
      %s161 = sadd.s32 %s160, 1
      %p164 = scmp.eq.s32.totalorder %s18, 7
      %p165 = scmp.ne.s32.totalorder %s160, %s162
      %p166 = scmp.eq.s32.totalorder %s18, 0
      %p167 = por %p165, %p166
      %p168 = scmp.ne.s32.totalorder %s160, %s162
      %p169 = scmp.eq.s32.totalorder %s23, 7
      %p170 = por %p168, %p169
      %p171 = scmp.ne.s32.totalorder %s162, %s163
      %p172 = scmp.eq.s32.totalorder %s23, 0
      %p173 = por %p171, %p172
      %p174 = scmp.ne.s32.totalorder %s162, %s163
      %p175 = scmp.eq.s32.totalorder %s24, 7
      %p176 = por %p174, %p175
      %p178 = scmp.ne.s32.totalorder %s163, %s177
      %p179 = scmp.eq.s32.totalorder %s24, 0
      %p180 = por %p178, %p179
      %s182 = sadd.s32 %s181, 1
      %p185 = scmp.eq.s32.totalorder %s18, 7
      %p186 = scmp.ne.s32.totalorder %s181, %s183
      %p187 = scmp.eq.s32.totalorder %s18, 0
      %p188 = por %p186, %p187
      %p189 = scmp.ne.s32.totalorder %s181, %s183
      %p190 = scmp.eq.s32.totalorder %s23, 7
      %p191 = por %p189, %p190
      %p192 = scmp.ne.s32.totalorder %s183, %s184
      %p193 = scmp.eq.s32.totalorder %s23, 0
      %p194 = por %p192, %p193
      %p195 = scmp.ne.s32.totalorder %s183, %s184
      %p196 = scmp.eq.s32.totalorder %s24, 7
      %p197 = por %p195, %p196
      %p199 = scmp.ne.s32.totalorder %s184, %s198
      %p200 = scmp.eq.s32.totalorder %s24, 0
      %p201 = por %p199, %p200
      %s203 = sadd.s32 %s202, 1
      %p206 = scmp.eq.s32.totalorder %s18, 7
      %p207 = scmp.ne.s32.totalorder %s202, %s204
      %p208 = scmp.eq.s32.totalorder %s18, 0
      %p209 = por %p207, %p208
      %p210 = scmp.ne.s32.totalorder %s202, %s204
      %p211 = scmp.eq.s32.totalorder %s23, 7
      %p212 = por %p210, %p211
      %p213 = scmp.ne.s32.totalorder %s204, %s205
      %p214 = scmp.eq.s32.totalorder %s23, 0
      %p215 = por %p213, %p214
      %p216 = scmp.ne.s32.totalorder %s204, %s205
      %p217 = scmp.eq.s32.totalorder %s24, 7
      %p218 = por %p216, %p217
      %p220 = scmp.ne.s32.totalorder %s205, %s219
      %p221 = scmp.eq.s32.totalorder %s24, 0
      %p222 = por %p220, %p221
      %s224 = sadd.s32 %s223, 1
      %p227 = scmp.eq.s32.totalorder %s18, 7
      %p228 = scmp.ne.s32.totalorder %s223, %s225
      %p229 = scmp.eq.s32.totalorder %s18, 0
      %p230 = por %p228, %p229
      %p231 = scmp.ne.s32.totalorder %s223, %s225
      %p232 = scmp.eq.s32.totalorder %s23, 7
      %p233 = por %p231, %p232
      %p234 = scmp.ne.s32.totalorder %s225, %s226
      %p235 = scmp.eq.s32.totalorder %s23, 0
      %p236 = por %p234, %p235
      %p237 = scmp.ne.s32.totalorder %s225, %s226
      %p238 = scmp.eq.s32.totalorder %s24, 7
      %p239 = por %p237, %p238
      %p241 = scmp.ne.s32.totalorder %s226, %s240
      %p242 = scmp.eq.s32.totalorder %s24, 0
      %p243 = por %p241, %p242
      %s244 = ssub.s32 %s26, %s33
      %s245 = ssub.s32 %s25, %s37
      %s246 = sor.u32 %s244, %s245
      %p247 = scmp.eq.s32.totalorder %s246, 0
      %s249 = sadd.s32 %s248, 1
      %s250 = scalar_select %p247, %s248, %s249
      %p253 = pneg %p247
      %p254 = scmp.eq.s32.totalorder %s18, 7
      %p255 = por %p253, %p254
      %p256 = scmp.ne.s32.totalorder %s248, %s251
      %p257 = scmp.eq.s32.totalorder %s18, 0
      %p258 = por %p256, %p257
      %p259 = scmp.ne.s32.totalorder %s248, %s251
      %p260 = scmp.eq.s32.totalorder %s23, 7
      %p261 = por %p259, %p260
      %p262 = scmp.ne.s32.totalorder %s251, %s252
      %p263 = scmp.eq.s32.totalorder %s23, 0
      %p264 = por %p262, %p263
      %p265 = scmp.ne.s32.totalorder %s251, %s252
      %p266 = scmp.eq.s32.totalorder %s24, 7
      %p267 = por %p265, %p266
      %p269 = scmp.ne.s32.totalorder %s252, %s268
      %p270 = scmp.eq.s32.totalorder %s24, 0
      %p271 = por %p269, %p270
      %p272 = scmp.le.s32.totalorder 1, %s18
      %p273 = scmp.lt.s32.totalorder %s18, 9
      %p274 = pnand %p272, %p273
      %p275 = pneg %p274
      // Predicated region
      $region9: #{tpu_custom_call.1} parent=5 // pred_check
        _
      $region10: #{tpu_custom_call.1} parent=5 // pred_check_branch
        %277 = sbr.rel (%p274) target = $region12
      $region11: #{tpu_custom_call.1} parent=5 // pred_region
        %s278 = ssub.s32 %s18, 1
        // Predicated region
        $region13: #{tpu_custom_call.1} parent=11 // pred_check
          %p279 = pneg %p84
        $region14: #{tpu_custom_call.1} parent=11 // pred_check_branch
          %281 = sbr.rel (%p279) target = $region16
        $region15: #{tpu_custom_call.1} parent=11 // pred_region
          %p282 = scmp.lt.s32.totalorder %s27, 0
          %s283 = scalar_select %p282, %s27, 0
          %s284 = smul.addr %s283, 8
          %s285 = scalar_lea.vmem %s1, %s284
        $region16: #{tpu_custom_call.1} parent=11 // pred_fallthru
          _
        // Predicated region
        $region17: #{tpu_custom_call.1} parent=11 // pred_check
          %p286 = pneg %p110
        $region18: #{tpu_custom_call.1} parent=11 // pred_check_branch
          %288 = sbr.rel (%p286) target = $region20
        $region19: #{tpu_custom_call.1} parent=11 // pred_region
          %p289 = scmp.lt.s32.totalorder %s27, 0
          %s290 = scalar_select %p289, %s27, 0
          %s291 = smul.addr %s290, 8
          %s292 = scalar_lea.vmem %s2, %s291
        $region20: #{tpu_custom_call.1} parent=11 // pred_fallthru
          _
        // Predicated region
        $region21: #{tpu_custom_call.1} parent=11 // pred_check
          %p293 = pneg %p131
        $region22: #{tpu_custom_call.1} parent=11 // pred_check_branch
          %295 = sbr.rel (%p293) target = $region24
        $region23: #{tpu_custom_call.1} parent=11 // pred_region
          _
        $region24: #{tpu_custom_call.1} parent=11 // pred_fallthru
          _
        // Predicated region
        $region25: #{tpu_custom_call.1} parent=11 // pred_check
          %p296 = pneg %p152
        $region26: #{tpu_custom_call.1} parent=11 // pred_check_branch
          %298 = sbr.rel (%p296) target = $region28
        $region27: #{tpu_custom_call.1} parent=11 // pred_region
          _
        $region28: #{tpu_custom_call.1} parent=11 // pred_fallthru
          _
        // Predicated region
        $region29: #{tpu_custom_call.1} parent=11 // pred_check
          %p299 = pneg %p173
        $region30: #{tpu_custom_call.1} parent=11 // pred_check_branch
          %301 = sbr.rel (%p299) target = $region32
        $region31: #{tpu_custom_call.1} parent=11 // pred_region
          _
        $region32: #{tpu_custom_call.1} parent=11 // pred_fallthru
          _
        // Predicated region
        $region33: #{tpu_custom_call.1} parent=11 // pred_check
          %p302 = pneg %p194
        $region34: #{tpu_custom_call.1} parent=11 // pred_check_branch
          %304 = sbr.rel (%p302) target = $region36
        $region35: #{tpu_custom_call.1} parent=11 // pred_region
          _
        $region36: #{tpu_custom_call.1} parent=11 // pred_fallthru
          _
        // Predicated region
        $region37: #{tpu_custom_call.1} parent=11 // pred_check
          %p305 = pneg %p215
        $region38: #{tpu_custom_call.1} parent=11 // pred_check_branch
          %307 = sbr.rel (%p305) target = $region40
        $region39: #{tpu_custom_call.1} parent=11 // pred_region
          _
        $region40: #{tpu_custom_call.1} parent=11 // pred_fallthru
          _
        // Predicated region
        $region41: #{tpu_custom_call.1} parent=11 // pred_check
          %p308 = pneg %p236
        $region42: #{tpu_custom_call.1} parent=11 // pred_check_branch
          %310 = sbr.rel (%p308) target = $region44
        $region43: #{tpu_custom_call.1} parent=11 // pred_region
          _
        $region44: #{tpu_custom_call.1} parent=11 // pred_fallthru
          _
      $region12: #{tpu_custom_call.1} parent=5 // pred_fallthru
        _
      %p311 = scmp.lt.s32.totalorder %s18, 8
      // Predicated region
      $region45: #{tpu_custom_call.1} parent=5 // pred_check
        %p312 = pneg %p311
      $region46: #{tpu_custom_call.1} parent=5 // pred_check_branch
        %314 = sbr.rel (%p312) target = $region48
      $region47: #{tpu_custom_call.1} parent=5 // pred_region
        // Predicated region
        $region49: #{tpu_custom_call.1} parent=47 // pred_check
          %p315 = pneg %p52
        $region50: #{tpu_custom_call.1} parent=47 // pred_check_branch
          %317 = sbr.rel (%p315) target = $region52
        $region51: #{tpu_custom_call.1} parent=47 // pred_region
          %p318 = scmp.lt.s32.totalorder %s26, 7
          %s319 = scalar_select %p318, %s26, 7
          %p320 = scmp.lt.s32.totalorder %s25, 0
          %s321 = scalar_select %p320, %s25, 0
          %s322 = smul.addr %s321, 8
          %s323 = smul.addr %s319, 8
          %s324 = sadd.s32 %s322, %s323
          %s325 = smul.addr %s324, 8
          %s326 = scalar_lea.vmem %s0, %s325
        $region52: #{tpu_custom_call.1} parent=47 // pred_fallthru
          _
      $region48: #{tpu_custom_call.1} parent=5 // pred_fallthru
        _
      %p327 = scmp.le.s32.totalorder 1, %s18
      %p328 = scmp.lt.s32.totalorder %s18, 9
      %p329 = pnand %p327, %p328
      %p330 = pneg %p329
      // Predicated region
      $region53: #{tpu_custom_call.1} parent=5 // pred_check
        _
      $region54: #{tpu_custom_call.1} parent=5 // pred_check_branch
        %332 = sbr.rel (%p329) target = $region56
      $region55: #{tpu_custom_call.1} parent=5 // pred_region
        %s333 = ssub.s32 %s18, 1
        %p334 = scmp.lt.s32.totalorder %s28, 7
        %s335 = scalar_select %p334, %s28, 7
        %p336 = scmp.lt.s32.totalorder %s27, 0
        %s337 = scalar_select %p336, %s27, 0
        %s338 = smul.addr %s337, 8
        %s339 = smul.addr %s335, 8
        %s340 = sadd.s32 %s338, %s339
        %s341 = smul.addr %s340, 8
        %s342 = scalar_lea.vmem %s0, %s341
        %p343 = pneg %p58
        %p344 = pneg %p55
        %p345 = scmp.lt.s32.totalorder %s27, 0
        %s346 = scalar_select %p345, %s27, 0
        %s347 = smul.addr %s346, 8
        %s348 = scalar_lea.vmem %s1, %s347
        %p349 = pneg %p84
        %p350 = pneg %p81
        %p351 = scmp.lt.s32.totalorder %s27, 0
        %s352 = scalar_select %p351, %s27, 0
        %s353 = smul.addr %s352, 8
        %s354 = scalar_lea.vmem %s2, %s353
        %p355 = pneg %p110
        %p356 = pneg %p107
        %p357 = pneg %p131
        %p358 = pneg %p128
        %p359 = pneg %p152
        %p360 = pneg %p149
        %p361 = pneg %p173
        %p362 = pneg %p170
        %p363 = pneg %p194
        %p364 = pneg %p191
        %p365 = pneg %p215
        %p366 = pneg %p212
        %p367 = pneg %p236
        %p368 = pneg %p233
        %p369 = pneg %p264
        %p370 = pneg %p261
        %s371 = sand.u32 %s251, 1
        %s372 = scalar_lea.sflag [#allocation5], %s371
        %s373 = sand.u32 %s251, 1
        %s374 = smul.addr %s373, 8
        %s375 = scalar_lea.vmem [#allocation4], %s374
        %p376 = scmp.lt.s32.totalorder %s28, 7
        %s377 = scalar_select %p376, %s28, 7
        %p378 = scmp.lt.s32.totalorder %s27, 0
        %s379 = scalar_select %p378, %s27, 0
        %s380 = smul.addr %s379, 8
        %s381 = smul.addr %s377, 8
        %s382 = sadd.s32 %s380, %s381
        %s383 = smul.addr %s382, 8
        %s384 = scalar_lea.vmem %s0, %s383
        %p385 = scmp.lt.s32.totalorder %s27, 0
        %s386 = scalar_select %p385, %s27, 0
        %s387 = smul.addr %s386, 8
        %s388 = scalar_lea.vmem %s1, %s387
        %p389 = scmp.lt.s32.totalorder %s27, 0
        %s390 = scalar_select %p389, %s27, 0
        %s391 = smul.addr %s390, 8
        %s392 = scalar_lea.vmem %s2, %s391
        %p394 = scmp.eq.s32.totalorder %s28, 0
        // Predicated region
        $region57: #{tpu_custom_call.1} parent=55 // pred_check
          %p395 = pneg %p394
        $region58: #{tpu_custom_call.1} parent=55 // pred_check_branch
          %397 = sbr.rel (%p395) target = $region60
        $region59: #{tpu_custom_call.1} parent=55 // pred_region
          %v398 = vld [vmem:[%s388] sm:$0xff]
          %vm399 = vcmask 261120
          %400 = vst.msk [vmem:[#allocation2] sm:$0xff] %vm399, %v398
          %v401 = vld [vmem:[%s392] sm:$0xff]
          %402 = vst.msk [vmem:[#allocation3] sm:$0xff] %vm399, %v401
        $region60: #{tpu_custom_call.1} parent=55 // pred_fallthru
          _
        %v403 = vld [vmem:[%s384] sm:$0xff]
        %v404 = vld [vmem:[%s384 + $0x8] sm:$0xff]
        %v405 = vld [vmem:[%s384 + $0x10] sm:$0xff]
        %v406 = vld [vmem:[%s384 + $0x18] sm:$0xff]
        %v407 = vld [vmem:[%s384 + $0x20] sm:$0xff]
        %v408 = vld [vmem:[%s384 + $0x28] sm:$0xff]
        %v409 = vld [vmem:[%s384 + $0x30] sm:$0xff]
        %v410 = vld [vmem:[%s384 + $0x38] sm:$0xff]
        %v411 = vpack.c.bf16 %v403, %v403
        %v412 = vpack.c.bf16 %v404, %v404
        %v413 = vpack.c.bf16 %v405, %v405
        %v414 = vpack.c.bf16 %v406, %v406
        %v415 = vpack.c.bf16 %v407, %v407
        %v416 = vpack.c.bf16 %v408, %v408
        %v417 = vpack.c.bf16 %v409, %v409
        %v418 = vpack.c.bf16 %v410, %v410
        %v419 = vld [vmem:[%s3] sm:$0xf]
        %v420 = vld [vmem:[%s3 + $0x4] sm:$0xf]
        %v421 = vld [vmem:[%s3 + $0x8] sm:$0xf]
        %v422 = vld [vmem:[%s3 + $0xc] sm:$0xf]
        %v423 = vld [vmem:[%s3 + $0x10] sm:$0xf]
        %v424 = vld [vmem:[%s3 + $0x14] sm:$0xf]
        %v425 = vld [vmem:[%s3 + $0x18] sm:$0xf]
        %v426 = vld [vmem:[%s3 + $0x1c] sm:$0xf]
        %v427 = vld [vmem:[%s3 + $0x20] sm:$0xf]
        %v428 = vld [vmem:[%s3 + $0x24] sm:$0xf]
        %v429 = vld [vmem:[%s3 + $0x28] sm:$0xf]
        %v430 = vld [vmem:[%s3 + $0x2c] sm:$0xf]
        %v431 = vld [vmem:[%s3 + $0x30] sm:$0xf]
        %v432 = vld [vmem:[%s3 + $0x34] sm:$0xf]
        %v433 = vld [vmem:[%s3 + $0x38] sm:$0xf]
        %v434 = vld [vmem:[%s3 + $0x3c] sm:$0xf]
        %v435 = vld [vmem:[%s3 + $0x40] sm:$0xf]
        %v436 = vld [vmem:[%s3 + $0x44] sm:$0xf]
        %v437 = vld [vmem:[%s3 + $0x48] sm:$0xf]
        %v438 = vld [vmem:[%s3 + $0x4c] sm:$0xf]
        %v439 = vld [vmem:[%s3 + $0x50] sm:$0xf]
        %v440 = vld [vmem:[%s3 + $0x54] sm:$0xf]
        %v441 = vld [vmem:[%s3 + $0x58] sm:$0xf]
        %v442 = vld [vmem:[%s3 + $0x5c] sm:$0xf]
        %v443 = vld [vmem:[%s3 + $0x60] sm:$0xf]
        %v444 = vld [vmem:[%s3 + $0x64] sm:$0xf]
        %v445 = vld [vmem:[%s3 + $0x68] sm:$0xf]
        %v446 = vld [vmem:[%s3 + $0x6c] sm:$0xf]
        %v447 = vld [vmem:[%s3 + $0x70] sm:$0xf]
        %v448 = vld [vmem:[%s3 + $0x74] sm:$0xf]
        %v449 = vld [vmem:[%s3 + $0x78] sm:$0xf]
        %v450 = vld [vmem:[%s3 + $0x7c] sm:$0xf]
        %v451 = vld [vmem:[%s3 + $0x80] sm:$0xf]
        %v452 = vld [vmem:[%s3 + $0x84] sm:$0xf]
        %v453 = vld [vmem:[%s3 + $0x88] sm:$0xf]
        %v454 = vld [vmem:[%s3 + $0x8c] sm:$0xf]
        %v455 = vld [vmem:[%s3 + $0x90] sm:$0xf]
        %v456 = vld [vmem:[%s3 + $0x94] sm:$0xf]
        %v457 = vld [vmem:[%s3 + $0x98] sm:$0xf]
        %v458 = vld [vmem:[%s3 + $0x9c] sm:$0xf]
        %v459 = vld [vmem:[%s3 + $0xa0] sm:$0xf]
        %v460 = vld [vmem:[%s3 + $0xa4] sm:$0xf]
        %v461 = vld [vmem:[%s3 + $0xa8] sm:$0xf]
        %v462 = vld [vmem:[%s3 + $0xac] sm:$0xf]
        %v463 = vld [vmem:[%s3 + $0xb0] sm:$0xf]
        %v464 = vld [vmem:[%s3 + $0xb4] sm:$0xf]
        %v465 = vld [vmem:[%s3 + $0xb8] sm:$0xf]
        %v466 = vld [vmem:[%s3 + $0xbc] sm:$0xf]
        %v467 = vld [vmem:[%s3 + $0xc0] sm:$0xf]
        %v468 = vld [vmem:[%s3 + $0xc4] sm:$0xf]
        %v469 = vld [vmem:[%s3 + $0xc8] sm:$0xf]
        %v470 = vld [vmem:[%s3 + $0xcc] sm:$0xf]
        %v471 = vld [vmem:[%s3 + $0xd0] sm:$0xf]
        %v472 = vld [vmem:[%s3 + $0xd4] sm:$0xf]
        %v473 = vld [vmem:[%s3 + $0xd8] sm:$0xf]
        %v474 = vld [vmem:[%s3 + $0xdc] sm:$0xf]
        %v475 = vld [vmem:[%s3 + $0xe0] sm:$0xf]
        %v476 = vld [vmem:[%s3 + $0xe4] sm:$0xf]
        %v477 = vld [vmem:[%s3 + $0xe8] sm:$0xf]
        %v478 = vld [vmem:[%s3 + $0xec] sm:$0xf]
        %v479 = vld [vmem:[%s3 + $0xf0] sm:$0xf]
        %v480 = vld [vmem:[%s3 + $0xf4] sm:$0xf]
        %v481 = vld [vmem:[%s3 + $0xf8] sm:$0xf]
        %v482 = vld [vmem:[%s3 + $0xfc] sm:$0xf]
        %v483 = vld [vmem:[%s3 + $0x100] sm:$0xf]
        %v484 = vld [vmem:[%s3 + $0x104] sm:$0xf]
        %v485 = vld [vmem:[%s3 + $0x108] sm:$0xf]
        %v486 = vld [vmem:[%s3 + $0x10c] sm:$0xf]
        %v487 = vld [vmem:[%s3 + $0x110] sm:$0xf]
        %v488 = vld [vmem:[%s3 + $0x114] sm:$0xf]
        %v489 = vld [vmem:[%s3 + $0x118] sm:$0xf]
        %v490 = vld [vmem:[%s3 + $0x11c] sm:$0xf]
        %v491 = vld [vmem:[%s3 + $0x120] sm:$0xf]
        %v492 = vld [vmem:[%s3 + $0x124] sm:$0xf]
        %v493 = vld [vmem:[%s3 + $0x128] sm:$0xf]
        %v494 = vld [vmem:[%s3 + $0x12c] sm:$0xf]
        %v495 = vld [vmem:[%s3 + $0x130] sm:$0xf]
        %v496 = vld [vmem:[%s3 + $0x134] sm:$0xf]
        %v497 = vld [vmem:[%s3 + $0x138] sm:$0xf]
        %v498 = vld [vmem:[%s3 + $0x13c] sm:$0xf]
        %v499 = vld [vmem:[%s3 + $0x140] sm:$0xf]
        %v500 = vld [vmem:[%s3 + $0x144] sm:$0xf]
        %v501 = vld [vmem:[%s3 + $0x148] sm:$0xf]
        %v502 = vld [vmem:[%s3 + $0x14c] sm:$0xf]
        %v503 = vld [vmem:[%s3 + $0x150] sm:$0xf]
        %v504 = vld [vmem:[%s3 + $0x154] sm:$0xf]
        %v505 = vld [vmem:[%s3 + $0x158] sm:$0xf]
        %v506 = vld [vmem:[%s3 + $0x15c] sm:$0xf]
        %v507 = vld [vmem:[%s3 + $0x160] sm:$0xf]
        %v508 = vld [vmem:[%s3 + $0x164] sm:$0xf]
        %v509 = vld [vmem:[%s3 + $0x168] sm:$0xf]
        %v510 = vld [vmem:[%s3 + $0x16c] sm:$0xf]
        %v511 = vld [vmem:[%s3 + $0x170] sm:$0xf]
        %v512 = vld [vmem:[%s3 + $0x174] sm:$0xf]
        %v513 = vld [vmem:[%s3 + $0x178] sm:$0xf]
        %v514 = vld [vmem:[%s3 + $0x17c] sm:$0xf]
        %v515 = vld [vmem:[%s3 + $0x180] sm:$0xf]
        %v516 = vld [vmem:[%s3 + $0x184] sm:$0xf]
        %v517 = vld [vmem:[%s3 + $0x188] sm:$0xf]
        %v518 = vld [vmem:[%s3 + $0x18c] sm:$0xf]
        %v519 = vld [vmem:[%s3 + $0x190] sm:$0xf]
        %v520 = vld [vmem:[%s3 + $0x194] sm:$0xf]
        %v521 = vld [vmem:[%s3 + $0x198] sm:$0xf]
        %v522 = vld [vmem:[%s3 + $0x19c] sm:$0xf]
        %v523 = vld [vmem:[%s3 + $0x1a0] sm:$0xf]
        %v524 = vld [vmem:[%s3 + $0x1a4] sm:$0xf]
        %v525 = vld [vmem:[%s3 + $0x1a8] sm:$0xf]
        %v526 = vld [vmem:[%s3 + $0x1ac] sm:$0xf]
        %v527 = vld [vmem:[%s3 + $0x1b0] sm:$0xf]
        %v528 = vld [vmem:[%s3 + $0x1b4] sm:$0xf]
        %v529 = vld [vmem:[%s3 + $0x1b8] sm:$0xf]
        %v530 = vld [vmem:[%s3 + $0x1bc] sm:$0xf]
        %v531 = vld [vmem:[%s3 + $0x1c0] sm:$0xf]
        %v532 = vld [vmem:[%s3 + $0x1c4] sm:$0xf]
        %v533 = vld [vmem:[%s3 + $0x1c8] sm:$0xf]
        %v534 = vld [vmem:[%s3 + $0x1cc] sm:$0xf]
        %v535 = vld [vmem:[%s3 + $0x1d0] sm:$0xf]
        %v536 = vld [vmem:[%s3 + $0x1d4] sm:$0xf]
        %v537 = vld [vmem:[%s3 + $0x1d8] sm:$0xf]
        %v538 = vld [vmem:[%s3 + $0x1dc] sm:$0xf]
        %v539 = vld [vmem:[%s3 + $0x1e0] sm:$0xf]
        %v540 = vld [vmem:[%s3 + $0x1e4] sm:$0xf]
        %v541 = vld [vmem:[%s3 + $0x1e8] sm:$0xf]
        %v542 = vld [vmem:[%s3 + $0x1ec] sm:$0xf]
        %v543 = vld [vmem:[%s3 + $0x1f0] sm:$0xf]
        %v544 = vld [vmem:[%s3 + $0x1f4] sm:$0xf]
        %v545 = vld [vmem:[%s3 + $0x1f8] sm:$0xf]
        %v546 = vld [vmem:[%s3 + $0x1fc] sm:$0xf]
        %v547 = vld [vmem:[%s4] sm:$0x1]
        %v549 = vlaneseq
        %v550 = vshrl.u32 %v549, 7
        %v551 = vsub.s32 0, %v550
        %v552 = vrot.slane %v547, %v551
        %v682 = vunpack.c.l.b16 %v419
        %v683 = vunpack.c.l.b16 %v420
        %v684 = vunpack.c.l.b16 %v421
        %v685 = vunpack.c.l.b16 %v422
        %v686 = vunpack.c.l.b16 %v423
        %v687 = vunpack.c.l.b16 %v424
        %v688 = vunpack.c.l.b16 %v425
        %v689 = vunpack.c.l.b16 %v426
        %v690 = vunpack.c.l.b16 %v427
        %v691 = vunpack.c.l.b16 %v428
        %v692 = vunpack.c.l.b16 %v429
        %v693 = vunpack.c.l.b16 %v430
        %v694 = vunpack.c.l.b16 %v431
        %v695 = vunpack.c.l.b16 %v432
        %v696 = vunpack.c.l.b16 %v433
        %v697 = vunpack.c.l.b16 %v434
        %v698 = vunpack.c.l.b16 %v435
        %v699 = vunpack.c.l.b16 %v436
        %v700 = vunpack.c.l.b16 %v437
        %v701 = vunpack.c.l.b16 %v438
        %v702 = vunpack.c.l.b16 %v439
        %v703 = vunpack.c.l.b16 %v440
        %v704 = vunpack.c.l.b16 %v441
        %v705 = vunpack.c.l.b16 %v442
        %v706 = vunpack.c.l.b16 %v443
        %v707 = vunpack.c.l.b16 %v444
        %v708 = vunpack.c.l.b16 %v445
        %v709 = vunpack.c.l.b16 %v446
        %v710 = vunpack.c.l.b16 %v447
        %v711 = vunpack.c.l.b16 %v448
        %v712 = vunpack.c.l.b16 %v449
        %v713 = vunpack.c.l.b16 %v450
        %v714 = vunpack.c.l.b16 %v451
        %v715 = vunpack.c.l.b16 %v452
        %v716 = vunpack.c.l.b16 %v453
        %v717 = vunpack.c.l.b16 %v454
        %v718 = vunpack.c.l.b16 %v455
        %v719 = vunpack.c.l.b16 %v456
        %v720 = vunpack.c.l.b16 %v457
        %v721 = vunpack.c.l.b16 %v458
        %v722 = vunpack.c.l.b16 %v459
        %v723 = vunpack.c.l.b16 %v460
        %v724 = vunpack.c.l.b16 %v461
        %v725 = vunpack.c.l.b16 %v462
        %v726 = vunpack.c.l.b16 %v463
        %v727 = vunpack.c.l.b16 %v464
        %v728 = vunpack.c.l.b16 %v465
        %v729 = vunpack.c.l.b16 %v466
        %v730 = vunpack.c.l.b16 %v467
        %v731 = vunpack.c.l.b16 %v468
        %v732 = vunpack.c.l.b16 %v469
        %v733 = vunpack.c.l.b16 %v470
        %v734 = vunpack.c.l.b16 %v471
        %v735 = vunpack.c.l.b16 %v472
        %v736 = vunpack.c.l.b16 %v473
        %v737 = vunpack.c.l.b16 %v474
        %v738 = vunpack.c.l.b16 %v475
        %v739 = vunpack.c.l.b16 %v476
        %v740 = vunpack.c.l.b16 %v477
        %v741 = vunpack.c.l.b16 %v478
        %v742 = vunpack.c.l.b16 %v479
        %v743 = vunpack.c.l.b16 %v480
        %v744 = vunpack.c.l.b16 %v481
        %v745 = vunpack.c.l.b16 %v482
        %v746 = vunpack.c.l.b16 %v483
        %v747 = vunpack.c.l.b16 %v484
        %v748 = vunpack.c.l.b16 %v485
        %v749 = vunpack.c.l.b16 %v486
        %v750 = vunpack.c.l.b16 %v487
        %v751 = vunpack.c.l.b16 %v488
        %v752 = vunpack.c.l.b16 %v489
        %v753 = vunpack.c.l.b16 %v490
        %v754 = vunpack.c.l.b16 %v491
        %v755 = vunpack.c.l.b16 %v492
        %v756 = vunpack.c.l.b16 %v493
        %v757 = vunpack.c.l.b16 %v494
        %v758 = vunpack.c.l.b16 %v495
        %v759 = vunpack.c.l.b16 %v496
        %v760 = vunpack.c.l.b16 %v497
        %v761 = vunpack.c.l.b16 %v498
        %v762 = vunpack.c.l.b16 %v499
        %v763 = vunpack.c.l.b16 %v500
        %v764 = vunpack.c.l.b16 %v501
        %v765 = vunpack.c.l.b16 %v502
        %v766 = vunpack.c.l.b16 %v503
        %v767 = vunpack.c.l.b16 %v504
        %v768 = vunpack.c.l.b16 %v505
        %v769 = vunpack.c.l.b16 %v506
        %v770 = vunpack.c.l.b16 %v507
        %v771 = vunpack.c.l.b16 %v508
        %v772 = vunpack.c.l.b16 %v509
        %v773 = vunpack.c.l.b16 %v510
        %v774 = vunpack.c.l.b16 %v511
        %v775 = vunpack.c.l.b16 %v512
        %v776 = vunpack.c.l.b16 %v513
        %v777 = vunpack.c.l.b16 %v514
        %v778 = vunpack.c.l.b16 %v515
        %v779 = vunpack.c.l.b16 %v516
        %v780 = vunpack.c.l.b16 %v517
        %v781 = vunpack.c.l.b16 %v518
        %v782 = vunpack.c.l.b16 %v519
        %v783 = vunpack.c.l.b16 %v520
        %v784 = vunpack.c.l.b16 %v521
        %v785 = vunpack.c.l.b16 %v522
        %v786 = vunpack.c.l.b16 %v523
        %v787 = vunpack.c.l.b16 %v524
        %v788 = vunpack.c.l.b16 %v525
        %v789 = vunpack.c.l.b16 %v526
        %v790 = vunpack.c.l.b16 %v527
        %v791 = vunpack.c.l.b16 %v528
        %v792 = vunpack.c.l.b16 %v529
        %v793 = vunpack.c.l.b16 %v530
        %v794 = vunpack.c.l.b16 %v531
        %v795 = vunpack.c.l.b16 %v532
        %v796 = vunpack.c.l.b16 %v533
        %v797 = vunpack.c.l.b16 %v534
        %v798 = vunpack.c.l.b16 %v535
        %v799 = vunpack.c.l.b16 %v536
        %v800 = vunpack.c.l.b16 %v537
        %v801 = vunpack.c.l.b16 %v538
        %v802 = vunpack.c.l.b16 %v539
        %v803 = vunpack.c.l.b16 %v540
        %v804 = vunpack.c.l.b16 %v541
        %v805 = vunpack.c.l.b16 %v542
        %v806 = vunpack.c.l.b16 %v543
        %v807 = vunpack.c.l.b16 %v544
        %v808 = vunpack.c.l.b16 %v545
        %v809 = vunpack.c.l.b16 %v546
        %v810 = vpack.c.b16 %v683, %v682
        %v811 = vpack.c.b16 %v685, %v684
        %v812 = vpack.c.b16 %v687, %v686
        %v813 = vpack.c.b16 %v689, %v688
        %v814 = vpack.c.b16 %v691, %v690
        %v815 = vpack.c.b16 %v693, %v692
        %v816 = vpack.c.b16 %v695, %v694
        %v817 = vpack.c.b16 %v697, %v696
        %v818 = vpack.c.b16 %v699, %v698
        %v819 = vpack.c.b16 %v701, %v700
        %v820 = vpack.c.b16 %v703, %v702
        %v821 = vpack.c.b16 %v705, %v704
        %v822 = vpack.c.b16 %v707, %v706
        %v823 = vpack.c.b16 %v709, %v708
        %v824 = vpack.c.b16 %v711, %v710
        %v825 = vpack.c.b16 %v713, %v712
        %v826 = vpack.c.b16 %v715, %v714
        %v827 = vpack.c.b16 %v717, %v716
        %v828 = vpack.c.b16 %v719, %v718
        %v829 = vpack.c.b16 %v721, %v720
        %v830 = vpack.c.b16 %v723, %v722
        %v831 = vpack.c.b16 %v725, %v724
        %v832 = vpack.c.b16 %v727, %v726
        %v833 = vpack.c.b16 %v729, %v728
        %v834 = vpack.c.b16 %v731, %v730
        %v835 = vpack.c.b16 %v733, %v732
        %v836 = vpack.c.b16 %v735, %v734
        %v837 = vpack.c.b16 %v737, %v736
        %v838 = vpack.c.b16 %v739, %v738
        %v839 = vpack.c.b16 %v741, %v740
        %v840 = vpack.c.b16 %v743, %v742
        %v841 = vpack.c.b16 %v745, %v744
        %v842 = vpack.c.b16 %v747, %v746
        %v843 = vpack.c.b16 %v749, %v748
        %v844 = vpack.c.b16 %v751, %v750
        %v845 = vpack.c.b16 %v753, %v752
        %v846 = vpack.c.b16 %v755, %v754
        %v847 = vpack.c.b16 %v757, %v756
        %v848 = vpack.c.b16 %v759, %v758
        %v849 = vpack.c.b16 %v761, %v760
        %v850 = vpack.c.b16 %v763, %v762
        %v851 = vpack.c.b16 %v765, %v764
        %v852 = vpack.c.b16 %v767, %v766
        %v853 = vpack.c.b16 %v769, %v768
        %v854 = vpack.c.b16 %v771, %v770
        %v855 = vpack.c.b16 %v773, %v772
        %v856 = vpack.c.b16 %v775, %v774
        %v857 = vpack.c.b16 %v777, %v776
        %v858 = vpack.c.b16 %v779, %v778
        %v859 = vpack.c.b16 %v781, %v780
        %v860 = vpack.c.b16 %v783, %v782
        %v861 = vpack.c.b16 %v785, %v784
        %v862 = vpack.c.b16 %v787, %v786
        %v863 = vpack.c.b16 %v789, %v788
        %v864 = vpack.c.b16 %v791, %v790
        %v865 = vpack.c.b16 %v793, %v792
        %v866 = vpack.c.b16 %v795, %v794
        %v867 = vpack.c.b16 %v797, %v796
        %v868 = vpack.c.b16 %v799, %v798
        %v869 = vpack.c.b16 %v801, %v800
        %v870 = vpack.c.b16 %v803, %v802
        %v871 = vpack.c.b16 %v805, %v804
        %v872 = vpack.c.b16 %v807, %v806
        %v873 = vpack.c.b16 %v809, %v808
        %938 = vmatprep.subr.bf16.mxu0 0
        %939 = vmatpush1.bf16.msra.mxu0 %v817
        %940 = vmatprep.subr.bf16.mxu0 0
        %941 = vmatpush1.bf16.msra.mxu0 %v816
        %942 = vmatprep.subr.bf16.mxu0 0
        %943 = vmatpush1.bf16.msra.mxu0 %v815
        %944 = vmatprep.subr.bf16.mxu0 0
        %945 = vmatpush1.bf16.msra.mxu0 %v814
        %946 = vmatprep.subr.bf16.mxu0 0
        %947 = vmatpush1.bf16.msra.mxu0 %v813
        %948 = vmatprep.subr.bf16.mxu0 0
        %949 = vmatpush1.bf16.msra.mxu0 %v812
        %950 = vmatprep.subr.bf16.mxu0 0
        %951 = vmatpush1.bf16.msra.mxu0 %v811
        %952 = vmatprep.subr.bf16.mxu0 0
        %953 = vmatpush1.bf16.msra.mxu0 %v810
        %954 = vmatprep.subr.bf16.mxu0 0
        %955 = vmatpush2.bf16.msra.mxu0 %v825
        %956 = vmatprep.subr.bf16.mxu0 0
        %957 = vmatpush2.bf16.msra.mxu0 %v824
        %958 = vmatprep.subr.bf16.mxu0 0
        %959 = vmatpush2.bf16.msra.mxu0 %v823
        %960 = vmatprep.subr.bf16.mxu0 0
        %961 = vmatpush2.bf16.msra.mxu0 %v822
        %962 = vmatprep.subr.bf16.mxu0 0
        %963 = vmatpush2.bf16.msra.mxu0 %v821
        %964 = vmatprep.subr.bf16.mxu0 0
        %965 = vmatpush2.bf16.msra.mxu0 %v820
        %966 = vmatprep.subr.bf16.mxu0 0
        %967 = vmatpush2.bf16.msra.mxu0 %v819
        %968 = vmatprep.subr.bf16.mxu0 0
        %969 = vmatpush2.bf16.msra.mxu0 %v818
        %970 = vmatprep.mubr.bf16.mxu0 %v412
        %971 = vmatmul.mubr.bf16.gmra.mxu0 %v411
        %v972 = vpop.f32.mrf.mxu0
        %v973 = vadd.f32 %v552, %v972
        %v974 = vpop.f32.mrf.mxu0
        %v975 = vpop.f32.mrf.mxu0
        %v976 = vpop.f32.mrf.mxu0
        %977 = vdwg.mxu0
        %978 = vmatprep.subr.bf16.mxu0 0
        %979 = vmatpush1.bf16.msra.mxu0 %v833
        %980 = vmatprep.subr.bf16.mxu0 0
        %981 = vmatpush1.bf16.msra.mxu0 %v832
        %982 = vmatprep.subr.bf16.mxu0 0
        %983 = vmatpush1.bf16.msra.mxu0 %v831
        %984 = vmatprep.subr.bf16.mxu0 0
        %985 = vmatpush1.bf16.msra.mxu0 %v830
        %986 = vmatprep.subr.bf16.mxu0 0
        %987 = vmatpush1.bf16.msra.mxu0 %v829
        %988 = vmatprep.subr.bf16.mxu0 0
        %989 = vmatpush1.bf16.msra.mxu0 %v828
        %990 = vmatprep.subr.bf16.mxu0 0
        %991 = vmatpush1.bf16.msra.mxu0 %v827
        %992 = vmatprep.subr.bf16.mxu0 0
        %993 = vmatpush1.bf16.msra.mxu0 %v826
        %994 = vmatprep.subr.bf16.mxu0 0
        %995 = vmatpush2.bf16.msra.mxu0 %v841
        %996 = vmatprep.subr.bf16.mxu0 0
        %997 = vmatpush2.bf16.msra.mxu0 %v840
        %998 = vmatprep.subr.bf16.mxu0 0
        %999 = vmatpush2.bf16.msra.mxu0 %v839
        %1000 = vmatprep.subr.bf16.mxu0 0
        %1001 = vmatpush2.bf16.msra.mxu0 %v838
        %1002 = vmatprep.subr.bf16.mxu0 0
        %1003 = vmatpush2.bf16.msra.mxu0 %v837
        %1004 = vmatprep.subr.bf16.mxu0 0
        %1005 = vmatpush2.bf16.msra.mxu0 %v836
        %1006 = vmatprep.subr.bf16.mxu0 0
        %1007 = vmatpush2.bf16.msra.mxu0 %v835
        %1008 = vmatprep.subr.bf16.mxu0 0
        %1009 = vmatpush2.bf16.msra.mxu0 %v834
        %1010 = vmatprep.mubr.bf16.mxu0 %v414
        %1011 = vmatmul.mubr.bf16.gmra.mxu0 %v413
        %v1012 = vpop.f32.mrf.mxu0
        %v1013 = vadd.f32 %v973, %v1012
        %v1014 = vpop.f32.mrf.mxu0
        %v1015 = vpop.f32.mrf.mxu0
        %v1016 = vpop.f32.mrf.mxu0
        %1017 = vdwg.mxu0
        %1018 = vmatprep.subr.bf16.mxu0 0
        %1019 = vmatpush1.bf16.msra.mxu0 %v849
        %1020 = vmatprep.subr.bf16.mxu0 0
        %1021 = vmatpush1.bf16.msra.mxu0 %v848
        %1022 = vmatprep.subr.bf16.mxu0 0
        %1023 = vmatpush1.bf16.msra.mxu0 %v847
        %1024 = vmatprep.subr.bf16.mxu0 0
        %1025 = vmatpush1.bf16.msra.mxu0 %v846
        %1026 = vmatprep.subr.bf16.mxu0 0
        %1027 = vmatpush1.bf16.msra.mxu0 %v845
        %1028 = vmatprep.subr.bf16.mxu0 0
        %1029 = vmatpush1.bf16.msra.mxu0 %v844
        %1030 = vmatprep.subr.bf16.mxu0 0
        %1031 = vmatpush1.bf16.msra.mxu0 %v843
        %1032 = vmatprep.subr.bf16.mxu0 0
        %1033 = vmatpush1.bf16.msra.mxu0 %v842
        %1034 = vmatprep.subr.bf16.mxu0 0
        %1035 = vmatpush2.bf16.msra.mxu0 %v857
        %1036 = vmatprep.subr.bf16.mxu0 0
        %1037 = vmatpush2.bf16.msra.mxu0 %v856
        %1038 = vmatprep.subr.bf16.mxu0 0
        %1039 = vmatpush2.bf16.msra.mxu0 %v855
        %1040 = vmatprep.subr.bf16.mxu0 0
        %1041 = vmatpush2.bf16.msra.mxu0 %v854
        %1042 = vmatprep.subr.bf16.mxu0 0
        %1043 = vmatpush2.bf16.msra.mxu0 %v853
        %1044 = vmatprep.subr.bf16.mxu0 0
        %1045 = vmatpush2.bf16.msra.mxu0 %v852
        %1046 = vmatprep.subr.bf16.mxu0 0
        %1047 = vmatpush2.bf16.msra.mxu0 %v851
        %1048 = vmatprep.subr.bf16.mxu0 0
        %1049 = vmatpush2.bf16.msra.mxu0 %v850
        %1050 = vmatprep.mubr.bf16.mxu0 %v416
        %1051 = vmatmul.mubr.bf16.gmra.mxu0 %v415
        %v1052 = vpop.f32.mrf.mxu0
        %v1053 = vadd.f32 %v1013, %v1052
        %v1054 = vpop.f32.mrf.mxu0
        %v1055 = vpop.f32.mrf.mxu0
        %v1056 = vpop.f32.mrf.mxu0
        %1057 = vdwg.mxu0
        %1058 = vmatprep.subr.bf16.mxu0 0
        %1059 = vmatpush1.bf16.msra.mxu0 %v865
        %1060 = vmatprep.subr.bf16.mxu0 0
        %1061 = vmatpush1.bf16.msra.mxu0 %v864
        %1062 = vmatprep.subr.bf16.mxu0 0
        %1063 = vmatpush1.bf16.msra.mxu0 %v863
        %1064 = vmatprep.subr.bf16.mxu0 0
        %1065 = vmatpush1.bf16.msra.mxu0 %v862
        %1066 = vmatprep.subr.bf16.mxu0 0
        %1067 = vmatpush1.bf16.msra.mxu0 %v861
        %1068 = vmatprep.subr.bf16.mxu0 0
        %1069 = vmatpush1.bf16.msra.mxu0 %v860
        %1070 = vmatprep.subr.bf16.mxu0 0
        %1071 = vmatpush1.bf16.msra.mxu0 %v859
        %1072 = vmatprep.subr.bf16.mxu0 0
        %1073 = vmatpush1.bf16.msra.mxu0 %v858
        %1074 = vmatprep.subr.bf16.mxu0 0
        %1075 = vmatpush2.bf16.msra.mxu0 %v873
        %1076 = vmatprep.subr.bf16.mxu0 0
        %1077 = vmatpush2.bf16.msra.mxu0 %v872
        %1078 = vmatprep.subr.bf16.mxu0 0
        %1079 = vmatpush2.bf16.msra.mxu0 %v871
        %1080 = vmatprep.subr.bf16.mxu0 0
        %1081 = vmatpush2.bf16.msra.mxu0 %v870
        %1082 = vmatprep.subr.bf16.mxu0 0
        %1083 = vmatpush2.bf16.msra.mxu0 %v869
        %1084 = vmatprep.subr.bf16.mxu0 0
        %1085 = vmatpush2.bf16.msra.mxu0 %v868
        %1086 = vmatprep.subr.bf16.mxu0 0
        %1087 = vmatpush2.bf16.msra.mxu0 %v867
        %1088 = vmatprep.subr.bf16.mxu0 0
        %1089 = vmatpush2.bf16.msra.mxu0 %v866
        %1090 = vmatprep.mubr.bf16.mxu0 %v418
        %1091 = vmatmul.mubr.bf16.gmra.mxu0 %v417
        %v1092 = vpop.f32.mrf.mxu0
        %v1093 = vadd.f32 %v1053, %v1092
        %v1094 = vpop.f32.mrf.mxu0
        %v1095 = vpop.f32.mrf.mxu0
        %v1096 = vpop.f32.mrf.mxu0
        %1097 = vdwg.mxu0
        %v1098 = vmax.f32 %v1093, 0.0
        %v1099 = vld [vmem:[#allocation2] sm:$0xff]
        %v1100 = vld [vmem:[#allocation3] sm:$0xff]
        %1102 = vrot.lane.b32.xlu0 %v1099, 32
        %v1103 = vpop.permute.xlu0 %1102
        %vm1105 = vcmask 261120
        %v1106 = vsel %vm1105, %v1098, %v1103
        %v1107 = vpack.c.bf16 %v1106, %v1106
        %v1108 = vld [vmem:[%s5] sm:$0xf]
        %v1109 = vld [vmem:[%s5 + $0x4] sm:$0xf]
        %v1110 = vld [vmem:[%s5 + $0x8] sm:$0xf]
        %v1111 = vld [vmem:[%s5 + $0xc] sm:$0xf]
        %v1112 = vld [vmem:[%s5 + $0x10] sm:$0xf]
        %v1113 = vld [vmem:[%s5 + $0x14] sm:$0xf]
        %v1114 = vld [vmem:[%s5 + $0x18] sm:$0xf]
        %v1115 = vld [vmem:[%s5 + $0x1c] sm:$0xf]
        %v1116 = vld [vmem:[%s6] sm:$0x1]
        %v1118 = vlaneseq
        %v1119 = vshrl.u32 %v1118, 7
        %v1120 = vsub.s32 0, %v1119
        %v1121 = vrot.slane %v1116, %v1120
        %v1131 = vunpack.c.l.b16 %v1108
        %v1132 = vunpack.c.l.b16 %v1109
        %v1133 = vunpack.c.l.b16 %v1110
        %v1134 = vunpack.c.l.b16 %v1111
        %v1135 = vunpack.c.l.b16 %v1112
        %v1136 = vunpack.c.l.b16 %v1113
        %v1137 = vunpack.c.l.b16 %v1114
        %v1138 = vunpack.c.l.b16 %v1115
        %v1139 = vpack.c.b16 %v1132, %v1131
        %v1140 = vpack.c.b16 %v1134, %v1133
        %v1141 = vpack.c.b16 %v1136, %v1135
        %v1142 = vpack.c.b16 %v1138, %v1137
        %vm1147 = vcmask 523264
        %v1149 = vsel %vm1147, %v1107, 0
        %1151 = vmatprep.subr.bf16.mxu0 0
        %1152 = vmatpush1.bf16.msra.mxu0 0
        %1153 = vmatprep.subr.bf16.mxu0 0
        %1154 = vmatpush1.bf16.msra.mxu0 0
        %1155 = vmatprep.subr.bf16.mxu0 0
        %1156 = vmatpush1.bf16.msra.mxu0 0
        %1157 = vmatprep.subr.bf16.mxu0 0
        %1158 = vmatpush1.bf16.msra.mxu0 0
        %1159 = vmatprep.subr.bf16.mxu0 0
        %1160 = vmatpush1.bf16.msra.mxu0 %v1142
        %1161 = vmatprep.subr.bf16.mxu0 0
        %1162 = vmatpush1.bf16.msra.mxu0 %v1141
        %1163 = vmatprep.subr.bf16.mxu0 0
        %1164 = vmatpush1.bf16.msra.mxu0 %v1140
        %1165 = vmatprep.subr.bf16.mxu0 0
        %1166 = vmatpush1.bf16.msra.mxu0 %v1139
        %1167 = vmatprep.subr.bf16.mxu0 0
        %1168 = vmatpush2.bf16.msra.mxu0 0
        %1169 = vmatprep.subr.bf16.mxu0 0
        %1170 = vmatpush2.bf16.msra.mxu0 0
        %1171 = vmatprep.subr.bf16.mxu0 0
        %1172 = vmatpush2.bf16.msra.mxu0 0
        %1173 = vmatprep.subr.bf16.mxu0 0
        %1174 = vmatpush2.bf16.msra.mxu0 0
        %1175 = vmatprep.subr.bf16.mxu0 0
        %1176 = vmatpush2.bf16.msra.mxu0 0
        %1177 = vmatprep.subr.bf16.mxu0 0
        %1178 = vmatpush2.bf16.msra.mxu0 0
        %1179 = vmatprep.subr.bf16.mxu0 0
        %1180 = vmatpush2.bf16.msra.mxu0 0
        %1181 = vmatprep.subr.bf16.mxu0 0
        %1182 = vmatpush2.bf16.msra.mxu0 0
        %1183 = vmatprep.mubr.bf16.mxu0 0
        %1184 = vmatmul.mubr.bf16.gmra.mxu0 %v1149
        %v1185 = vpop.f32.mrf.mxu0
        %v1186 = vadd.f32 %v1121, %v1185
        %v1187 = vpop.f32.mrf.mxu0
        %v1188 = vpop.f32.mrf.mxu0
        %v1189 = vpop.f32.mrf.mxu0
        %1190 = vdwg.mxu0
        %v1191 = vxor.u32 %v1186, 2147483648
        %v1192 = vmul.f32 %v1191, 1.442695
        %v1193 = vpow.pop %v1192
        %v1194 = vadd.f32 %v1193, 1.0
        %v1195 = vrcp.pop %v1194
        %v1196 = vmul.f32 1.0, %v1195
        %v1197 = vtanh.pop %v1186
        %1199 = vrot.lane.b32.xlu0 %v1100, 32
        %v1200 = vpop.permute.xlu0 %1199
        %v1202 = vmul.f32 %v1196, %v1200
        %1204 = vrot.lane.b32.xlu0 %v1197, 64
        %v1205 = vpop.permute.xlu0 %1204
        %v1207 = vmul.f32 %v1196, %v1205
        %1209 = vrot.lane.b32.xlu0 %v1207, 32
        %v1210 = vpop.permute.xlu0 %1209
        %v1212 = vadd.f32 %v1202, %v1210
        %v1213 = vtanh.pop %v1212
        %1215 = vrot.lane.b32.xlu0 %v1213, 64
        %v1216 = vpop.permute.xlu0 %1215
        %v1218 = vmul.f32 %v1196, %v1216
        %v1219 = vpack.c.bf16 %v1218, %v1218
        %v1220 = vld [vmem:[%s7] sm:$0xf]
        %v1221 = vld [vmem:[%s7 + $0x4] sm:$0xf]
        %v1222 = vld [vmem:[%s7 + $0x8] sm:$0xf]
        %v1223 = vld [vmem:[%s7 + $0xc] sm:$0xf]
        %v1224 = vld [vmem:[%s8] sm:$0x1]
        %v1226 = vlaneseq
        %v1227 = vshrl.u32 %v1226, 7
        %v1228 = vsub.s32 0, %v1227
        %v1229 = vrot.slane %v1224, %v1228
        %1232 = vrot.lane.b32.xlu0 %v1219, 32
        %v1233 = vpop.permute.xlu0 %1232
        %v1238 = vunpack.c.l.b16 %v1220
        %v1239 = vunpack.c.l.b16 %v1221
        %v1240 = vunpack.c.l.b16 %v1222
        %v1241 = vunpack.c.l.b16 %v1223
        %v1242 = vpack.c.b16 %v1239, %v1238
        %v1243 = vpack.c.b16 %v1241, %v1240
        %v1247 = vsel %vm1105, %v1233, 0
        %1249 = vmatprep.subr.bf16.mxu0 0
        %1250 = vmatpush1.bf16.msra.mxu0 0
        %1251 = vmatprep.subr.bf16.mxu0 0
        %1252 = vmatpush1.bf16.msra.mxu0 0
        %1253 = vmatprep.subr.bf16.mxu0 0
        %1254 = vmatpush1.bf16.msra.mxu0 0
        %1255 = vmatprep.subr.bf16.mxu0 0
        %1256 = vmatpush1.bf16.msra.mxu0 0
        %1257 = vmatprep.subr.bf16.mxu0 0
        %1258 = vmatpush1.bf16.msra.mxu0 0
        %1259 = vmatprep.subr.bf16.mxu0 0
        %1260 = vmatpush1.bf16.msra.mxu0 0
        %1261 = vmatprep.subr.bf16.mxu0 0
        %1262 = vmatpush1.bf16.msra.mxu0 %v1243
        %1263 = vmatprep.subr.bf16.mxu0 0
        %1264 = vmatpush1.bf16.msra.mxu0 %v1242
        %1265 = vmatprep.subr.bf16.mxu0 0
        %1266 = vmatpush2.bf16.msra.mxu0 0
        %1267 = vmatprep.subr.bf16.mxu0 0
        %1268 = vmatpush2.bf16.msra.mxu0 0
        %1269 = vmatprep.subr.bf16.mxu0 0
        %1270 = vmatpush2.bf16.msra.mxu0 0
        %1271 = vmatprep.subr.bf16.mxu0 0
        %1272 = vmatpush2.bf16.msra.mxu0 0
        %1273 = vmatprep.subr.bf16.mxu0 0
        %1274 = vmatpush2.bf16.msra.mxu0 0
        %1275 = vmatprep.subr.bf16.mxu0 0
        %1276 = vmatpush2.bf16.msra.mxu0 0
        %1277 = vmatprep.subr.bf16.mxu0 0
        %1278 = vmatpush2.bf16.msra.mxu0 0
        %1279 = vmatprep.subr.bf16.mxu0 0
        %1280 = vmatpush2.bf16.msra.mxu0 0
        %1281 = vmatprep.mubr.bf16.mxu0 0
        %1282 = vmatmul.mubr.bf16.gmra.mxu0 %v1247
        %v1283 = vpop.f32.mrf.mxu0
        %v1284 = vadd.f32 %v1229, %v1283
        %v1285 = vpop.f32.mrf.mxu0
        %v1286 = vpop.f32.mrf.mxu0
        %v1287 = vpop.f32.mrf.mxu0
        %1288 = vdwg.mxu0
        %1290 = vrot.lane.b32.xlu0 %v1218, 32
        %v1291 = vpop.permute.xlu0 %1290
        %1294 = vrot.lane.b32.xlu0 %v1284, 64
        %v1295 = vpop.permute.xlu0 %1294
        %v1297 = vsel %vm1105, %v1291, %v1212
        %v1298 = vsel %vm1147, %v1297, %v1295
        %1299 = vst [vmem:[%s375] sm:$0xff] %v1298
        %1300 = vst.msk [vmem:[#allocation2] sm:$0xff] %vm1105, %v1291
        %1302 = vrot.lane.b32.xlu0 %v1212, 96
        %v1303 = vpop.permute.xlu0 %1302
        %1305 = vst.msk [vmem:[#allocation3] sm:$0xff] %vm1105, %v1303
        %s1306 = sand.u32 %s251, 1
        %s1307 = scalar_lea.sflag [#allocation5], %s1306
        %s1308 = sand.u32 %s251, 1
        %s1309 = smul.addr %s1308, 8
        %s1310 = scalar_lea.vmem [#allocation4], %s1309
        // Predicated region
        $region61: #{tpu_custom_call.1} parent=55 // pred_check
          %p1311 = pneg %p261
        $region62: #{tpu_custom_call.1} parent=55 // pred_check_branch
          %1313 = sbr.rel (%p1311) target = $region64
        $region63: #{tpu_custom_call.1} parent=55 // pred_region
          %s1315 = ssub.s32 128, 128
          %1316 = vsyncadd %s1307, %s1315
          %s1317 = sadd.s32 %s27, %s28
          %s1318 = smul.addr %s1317, 128
          %s1319 = scalar_lea.hbm %s9, %s1318
          %s1321 = sshll.u32 %s1310, 4
          %s1322 = int_to_ptr.vmem [resolvable:$true] %s1321
          %1324 = dma.vmem_to_hbm [thread:$0]  %s1322, 128, %s1319, %s1307
        $region64: #{tpu_custom_call.1} parent=55 // pred_fallthru
          _
      $region56: #{tpu_custom_call.1} parent=5 // pred_fallthru
        _
      %p1325 = scmp.le.s32.totalorder 2, %s18
      // Predicated region
      $region65: #{tpu_custom_call.1} parent=5 // pred_check
        %p1326 = pneg %p1325
      $region66: #{tpu_custom_call.1} parent=5 // pred_check_branch
        %1328 = sbr.rel (%p1326) target = $region68
      $region67: #{tpu_custom_call.1} parent=5 // pred_region
        %s1329 = ssub.s32 %s18, 2
        // Predicated region
        $region69: #{tpu_custom_call.1} parent=67 // pred_check
          %p1330 = pneg %p267
        $region70: #{tpu_custom_call.1} parent=67 // pred_check_branch
          %1332 = sbr.rel (%p1330) target = $region72
        $region71: #{tpu_custom_call.1} parent=67 // pred_region
          %s1333 = sand.u32 %s252, 1
          %s1334 = scalar_lea.sflag [#allocation5], %s1333
          %s1335 = sand.u32 %s252, 1
          %s1336 = smul.addr %s1335, 8
          %s1337 = scalar_lea.vmem [#allocation4], %s1336
          %1338 = dma.done %s1334, 128
        $region72: #{tpu_custom_call.1} parent=67 // pred_fallthru
          _
      $region68: #{tpu_custom_call.1} parent=5 // pred_fallthru
        _
    $region6: #{tpu_custom_call.1} parent=1 // loop_footer
      %s22 = sadd.s32 1, %s18
    $region7: #{tpu_custom_call.1} parent=1 // loop_footer_branch
      %17 = sbr.rel target = $region3
    $region8: #{tpu_custom_call.1} parent=1 // loop_exit
      _
    %1339 = vsyncpa [#allocation5], 1
    %s1340 = scalar_lea.sflag [#allocation5], 1
    %1341 = vsyncpa %s1340, 1

</llo_original>
